<compile_context>
chip_gen: v5e
topology: v5e:2x2
jax: 0.10.0
libtpu: 0.0.40
codegen_flags: <defaults>
</compile_context>

<pallas_src>
import jax
import jax.numpy as jnp
from jax.experimental import pallas as pl
from jax.experimental.pallas import tpu as pltpu


def _round_up(x, n):
    return ((x + n - 1) // n) * n


def _auto_recon_kernel(x_ref, w_ref, b_ref, o_ref):
    # x_ref: (TB, TD, F)   TB batch elements, TD diagonal rows of each
    # w_ref: (TD, F)       matching rows of Rk_weight
    # b_ref: (1, 1, TD)    matching bias entries (lane-dense)
    # o_ref: (TB, TD)      per-batch diagonal of the linear output
    x = x_ref[...].astype(jnp.float32)          # f32 accumulate (matches torch linear)
    w = w_ref[...].astype(jnp.float32)
    b = b_ref[...].astype(jnp.float32)          # (1, 1, TD)
    row = jnp.sum(x * w, axis=-1)               # VPU mul + XLU lane reduce -> (TB, TD)
    o_ref[...] = (row + b[0]).astype(o_ref.dtype)


def _vmem_budgets():
    """(vmem_limit_bytes, x_budget_bytes, weight_block_budget_bytes), generation-aware."""
    try:
        cap = pltpu.get_tpu_info().vmem_capacity_bytes
    except Exception:
        cap = 64 * 1024 * 1024                  # conservative: assume v7x-class VMEM
    if cap <= 64 * 1024 * 1024:                 # v7x: 64 MiB per TensorCore
        return 38 * 1024 * 1024, 16 * 1024 * 1024, 4 * 1024 * 1024
    # v5e / v6e: 128 MiB physical VMEM
    return 88 * 1024 * 1024, 40 * 1024 * 1024, 6 * 1024 * 1024


def _choose_tiles(B, S, m, D, F, itemsize):
    """Pick (TD, grid_d, TB, grid_b, D_proc, vmem_limit).

    - D_proc: rows actually processed when D is not tiled (rounded up to 8, never
      past S) so the big input is never sliced in the wrapper.
    - TD: D-tile; multiple of 128 whenever D is tiled (output lane rule), else D_proc.
    - TB: batch elements per step, sized from a padded-bytes budget (2 pipeline
      buffers of the x block + one f32 intermediate), multiple of 8 or == B.
    """
    F_pad = _round_up(F, 128)                   # VMEM pads the lane dim to 128
    vmem_limit, x_budget, w_budget = _vmem_budgets()

    d_proc = D if D % 8 == 0 else min(S, _round_up(D, 8))
    td, grid_d = d_proc, 1
    if d_proc * F_pad * 4 > w_budget and D >= 256:
        td = (w_budget // (F_pad * 4)) // 128 * 128
        td = max(128, min(td, (D // 128) * 128))
        grid_d = -(-D // td)
        if grid_d == 1:
            td, grid_d = d_proc, 1

    # Per-batch-element bytes per step: two pipeline buffers of the x block plus
    # one f32 intermediate for the (x * w) product before the lane reduction.
    per_b = td * F_pad * (2 * itemsize + 4)
    tb = max(1, x_budget // per_b)
    if tb >= B:
        tb = B
    else:
        tb = B if B < 8 else max(8, (tb // 8) * 8)
        tb = min(tb, B)
    # Keep >= 2 batch steps so the parallel axis can shard across v7x's two TCs.
    if B >= 16 and grid_d == 1:
        tb = min(tb, _round_up(-(-B // 2), 8))
    grid_b = -(-B // tb)
    return td, grid_d, tb, grid_b, d_proc, vmem_limit


def auto_reconstruction(inputs, weight, bias):
    """Pallas equivalent of AutoReconstruction.forward.

    inputs: (B, S, F); weight: (m, F); bias: (m,)
    returns (B, D), D = min(S, m): per-batch diagonal of linear(inputs, weight, bias).
    """
    B, S, F = inputs.shape
    m, Fw = weight.shape
    assert F == Fw, "last dim of inputs must equal input_nonlins"
    D = min(S, m)
    itemsize = inputs.dtype.itemsize

    td, grid_d, tb, grid_b, d_proc, vmem_limit = _choose_tiles(B, S, m, D, F, itemsize)

    # Weight / bias prep touches only the tiny (m, F)/(m,) arrays, never the input.
    if grid_d == 1:
        if m == td:
            w_arr = weight
        elif m > td:
            w_arr = weight[:td]
        else:
            w_arr = jnp.pad(weight, ((0, td - m), (0, 0)))
        out_cols = td                            # == d_proc; sliced back to D below
    else:
        w_arr = weight                           # 128-aligned TD blocks, ragged last ok
        out_cols = D                             # ragged last d-block writes are dropped

    b_len = grid_d * td
    b_flat = bias[:b_len] if m >= b_len else jnp.pad(bias, (0, b_len - m))
    b_arr = b_flat.reshape(grid_d, 1, td)        # lane-dense bias blocks

    x_spec = pl.BlockSpec((tb, td, F), lambda di, bi: (bi, di, 0))
    o_spec = pl.BlockSpec((tb, td), lambda di, bi: (bi, di))
    w_map = lambda di, bi: (di, 0)
    b_map = lambda di, bi: (di, 0, 0)
    if grid_d == 1:
        # Grid-invariant: single resident buffer instead of the default double buffer.
        w_spec = pl.BlockSpec((td, F), w_map, pipeline_mode=pl.Buffered(1))
        b_spec = pl.BlockSpec((1, 1, td), b_map, pipeline_mode=pl.Buffered(1))
    else:
        w_spec = pl.BlockSpec((td, F), w_map)
        b_spec = pl.BlockSpec((1, 1, td), b_map)

    cost = pl.CostEstimate(
        flops=2 * B * D * F,
        transcendentals=0,
        bytes_accessed=(B * D * F + D * F + D + B * D) * itemsize,
    )

    out = pl.pallas_call(
        _auto_recon_kernel,
        out_shape=jax.ShapeDtypeStruct((B, out_cols), inputs.dtype),
        grid_spec=pltpu.PrefetchScalarGridSpec(
            num_scalar_prefetch=0,
            grid=(grid_d, grid_b),               # d outer so weight blocks are reused
            in_specs=[x_spec, w_spec, b_spec],
            out_specs=o_spec,
        ),
        compiler_params=pltpu.CompilerParams(
            dimension_semantics=("parallel", "parallel"),
            vmem_limit_bytes=vmem_limit,
        ),
        cost_estimate=cost,
    )(inputs, w_arr, b_arr)

    if out_cols != D:
        out = out[:, :D]                         # tiny (B, d_proc) slice, not the input
    return out


def _reference(inputs, weight, bias):
    # Pure-JAX reference mirroring the PyTorch forward exactly.
    lin = jnp.einsum("bsf,mf->bsm", inputs, weight) + bias   # nn.functional.linear
    D = min(inputs.shape[1], weight.shape[0])
    idx = jnp.arange(D)
    return lin[:, idx, idx]                                   # torch.diag per batch


if __name__ == "__main__":
    # Small shapes consistent with the module: B=2, seq=8, m=8, input_nonlins=32.
    B, S, m, F = 2, 8, 8, 32

    key = jax.random.PRNGKey(0)
    inputs = jax.random.normal(key, (B, S, F), dtype=jnp.float32)

    # Deterministic parameter init matching the module's __init__:
    #   Rk_weight = 1e-10 * ones(m, input_nonlins); bias = 1e-10 * ones(m)
    weight = 1e-10 * jnp.ones((m, F), dtype=jnp.float32)
    bias = 1e-10 * jnp.ones((m,), dtype=jnp.float32)

    out = auto_reconstruction(inputs, weight, bias)
    out = jax.block_until_ready(out)

    ref = _reference(inputs, weight, bias)
    assert out.shape == (B, min(S, m))
    assert jnp.allclose(out, ref, rtol=1e-6, atol=1e-12), "mismatch vs reference"

    print("KERNEL_OK")
</pallas_src>

<mosaic_0001>
module attributes {stable_mosaic.version = 11 : i64} {
  func.func @_auto_recon_kernel(%arg0: i32, %arg1: i32, %arg2: memref<2x8x32xf32, #tpu.memory_space<vmem>>, %arg3: memref<8x32xf32, #tpu.memory_space<vmem>>, %arg4: memref<1x1x8xf32, #tpu.memory_space<vmem>>, %arg5: memref<2x8xf32, #tpu.memory_space<vmem>>) attributes {dimension_semantics = [#tpu.dimension_semantics<parallel>, #tpu.dimension_semantics<parallel>], iteration_bounds = array<i64: 1, 1>, scalar_prefetch = 0 : i64, scratch_operands = 0 : i64, tpu.core_type = #tpu.core_type<tc>, window_params = [{transform_indices = @transform_0, window_bounds = array<i64: 2, 8, 32>}, {pipeline_mode = #tpu.pipeline_mode<synchronous>, transform_indices = @transform_1, window_bounds = array<i64: 8, 32>}, {pipeline_mode = #tpu.pipeline_mode<synchronous>, transform_indices = @transform_2, window_bounds = array<i64: 1, 1, 8>}, {transform_indices = @transform_3, window_bounds = array<i64: 2, 8>}]} {
    %c0 = arith.constant 0 : index
    %c0_0 = arith.constant 0 : index
    %c0_1 = arith.constant 0 : index
    %0 = vector.load %arg2[%c0, %c0_0, %c0_1] : memref<2x8x32xf32, #tpu.memory_space<vmem>>, vector<2x8x32xf32>
    %c0_2 = arith.constant 0 : index
    %c0_3 = arith.constant 0 : index
    %1 = vector.load %arg3[%c0_2, %c0_3] : memref<8x32xf32, #tpu.memory_space<vmem>>, vector<8x32xf32>
    %c0_4 = arith.constant 0 : index
    %c0_5 = arith.constant 0 : index
    %c0_6 = arith.constant 0 : index
    %2 = vector.load %arg4[%c0_4, %c0_5, %c0_6] : memref<1x1x8xf32, #tpu.memory_space<vmem>>, vector<1x1x8xf32>
    %3 = vector.shape_cast %1 : vector<8x32xf32> to vector<1x8x32xf32>
    %4 = vector.broadcast %3 : vector<1x8x32xf32> to vector<2x8x32xf32>
    %5 = arith.mulf %0, %4 : vector<2x8x32xf32>
    %cst = arith.constant dense<0.000000e+00> : vector<2x8xf32>
    %6 = vector.multi_reduction <add>, %5, %cst [2] : vector<2x8x32xf32> to vector<2x8xf32>
    %7 = vector.shape_cast %2 : vector<1x1x8xf32> to vector<1x8xf32>
    %8 = vector.broadcast %7 : vector<1x8xf32> to vector<2x8xf32>
    %9 = arith.addf %6, %8 : vector<2x8xf32>
    %c0_7 = arith.constant 0 : index
    %c0_8 = arith.constant 0 : index
    %10 = vector.load %arg5[%c0_7, %c0_8] : memref<2x8xf32, #tpu.memory_space<vmem>>, vector<2x8xf32>
    tpu.vector_store %arg5[%c0_7, %c0_8], %9 {strides = array<i32>} : memref<2x8xf32, #tpu.memory_space<vmem>>, vector<2x8xf32>,
    return
  }
  func.func @transform_0(%arg0: i32, %arg1: i32) -> (i32, i32, i32) {
    %c0_i32 = arith.constant 0 : i32
    %c0_i32_0 = arith.constant 0 : i32
    return %arg1, %arg0, %c0_i32 : i32, i32, i32
  }
  func.func @transform_1(%arg0: i32, %arg1: i32) -> (i32, i32) {
    %c0_i32 = arith.constant 0 : i32
    %c0_i32_0 = arith.constant 0 : i32
    return %arg0, %c0_i32 : i32, i32
  }
  func.func @transform_2(%arg0: i32, %arg1: i32) -> (i32, i32, i32) {
    %c0_i32 = arith.constant 0 : i32
    %c0_i32_0 = arith.constant 0 : i32
    %c0_i32_1 = arith.constant 0 : i32
    return %arg0, %c0_i32, %c0_i32_0 : i32, i32, i32
  }
  func.func @transform_3(%arg0: i32, %arg1: i32) -> (i32, i32) {
    %c0_i32 = arith.constant 0 : i32
    return %arg1, %arg0 : i32, i32
  }
}

</mosaic_0001>

<llo_original>
// kernel: tpu_custom_call.1
$region0: #{tpu_custom_call.1}
  #allocation0 [shape = 'u32[]', space=smem, size = 0x4, offset = 0x4, fixed_abs, tag = 'smem constant byte address 0x4 - core index']
  #allocation1 [shape = 'u32[72,128]{1,0:T(1,128)}', space=vmem, size = 0x9000, scoped, tag = 'internal scratch']
  %s0 = inlined_call_operand.hbm [shape: f32[2,8,32], index: 0, kind: input, shape index: {}]
  %s1 = inlined_call_operand.hbm [shape: f32[8,32], index: 1, kind: input, shape index: {}]
  %s2 = inlined_call_operand.vmem [shape: f32[1,1,8], index: 2, kind: input, shape index: {}]
  %s3 = inlined_call_operand.hbm [shape: f32[2,8], index: 3, kind: output, shape index: {}]
  %s4 = sld [smem:[#allocation0]]
  $region30: #{tpu_custom_call.1} parent=0
    _
  %s6 = ssub.s32 1, %s4
  %s7 = scalar_select 0, %s6, %s4
  $region1: #{tpu_custom_call.1} parent=0
    #allocation2 [shape = 'u8[8192]{0}', space=vmem, size = 0x2000, scoped, tag = 'input window, operand 0, single buffered']
    #allocation3 [shape = 's32[1]{0}', space=sflag, size = 0x4, scoped, tag = 'scoped memory for tpu_custom_call.1']
    #allocation4 [shape = 's32[1]{0}', space=sflag, size = 0x4, scoped, tag = 'scoped memory for tpu_custom_call.1']
    #allocation5 [shape = 'u8[4096]{0}', space=vmem, size = 0x1000, scoped, tag = 'input window, operand 1, single buffered']
    #allocation6 [shape = 's32[1]{0}', space=sflag, size = 0x4, scoped, tag = 'scoped memory for tpu_custom_call.1']
    #allocation7 [shape = 'u8[1024]{0}', space=vmem, size = 0x400, scoped, tag = 'output window, operand 0, single buffered']
    %8 = vsyncpa [#allocation3], 0
    %9 = vsyncpa [#allocation6], 0
    %10 = vsyncpa [#allocation4], 0
    // Predicated region
    $region2: #{tpu_custom_call.1} parent=1 // pred_check
      _
    $region3: #{tpu_custom_call.1} parent=1 // pred_check_branch
      %12 = sbr.rel (0) target = $region5
    $region4: #{tpu_custom_call.1} parent=1 // pred_region
      %14 = vsyncadd [#allocation3], 0
      %s15 = sshll.u32 %s0, 4
      %s16 = int_to_ptr.hbm [resolvable:$true] %s15
      %s17 = sshll.u32 [#allocation2], 4
      %s18 = int_to_ptr.vmem [resolvable:$true] %s17
      %23 = dma.hbm_to_vmem [thread:$0]  %s16, 256, %s18, [#allocation3], 128, 128, 8
    $region5: #{tpu_custom_call.1} parent=1 // pred_fallthru
      _
    // Predicated region
    $region6: #{tpu_custom_call.1} parent=1 // pred_check
      _
    $region7: #{tpu_custom_call.1} parent=1 // pred_check_branch
      %25 = sbr.rel (0) target = $region9
    $region8: #{tpu_custom_call.1} parent=1 // pred_region
      %27 = vsyncadd [#allocation6], 0
      %s29 = sshll.u32 %s1, 4
      %s30 = int_to_ptr.hbm [resolvable:$true] %s29
      %s31 = sshll.u32 [#allocation5], 4
      %s32 = int_to_ptr.vmem [resolvable:$true] %s31
      %34 = dma.hbm_to_vmem [thread:$0]  %s30, 128, %s32, [#allocation6]
    $region9: #{tpu_custom_call.1} parent=1 // pred_fallthru
      _
    // Predicated region
    $region10: #{tpu_custom_call.1} parent=1 // pred_check
      _
    $region11: #{tpu_custom_call.1} parent=1 // pred_check_branch
      %36 = sbr.rel (0) target = $region13
    $region12: #{tpu_custom_call.1} parent=1 // pred_region
      _
    $region13: #{tpu_custom_call.1} parent=1 // pred_fallthru
      _
    // Predicated region
    $region14: #{tpu_custom_call.1} parent=1 // pred_check
      _
    $region15: #{tpu_custom_call.1} parent=1 // pred_check_branch
      %38 = sbr.rel (0) target = $region17
    $region16: #{tpu_custom_call.1} parent=1 // pred_region
      %40 = dma.done [#allocation3], 256
    $region17: #{tpu_custom_call.1} parent=1 // pred_fallthru
      _
    // Predicated region
    $region18: #{tpu_custom_call.1} parent=1 // pred_check
      _
    $region19: #{tpu_custom_call.1} parent=1 // pred_check_branch
      %42 = sbr.rel (0) target = $region21
    $region20: #{tpu_custom_call.1} parent=1 // pred_region
      %44 = dma.done [#allocation6], 128
    $region21: #{tpu_custom_call.1} parent=1 // pred_fallthru
      _
    %v45 = vld [vmem:[#allocation2] sm:$0xff]
    %v46 = vld [vmem:[#allocation2 + $0x8] sm:$0xff]
    %v47 = vld [vmem:[#allocation5] sm:$0xff]
    %v48 = vld [vmem:[%s2] sm:$0x1]
    %v49 = vmul.f32 %v45, %v47
    %v50 = vmul.f32 %v46, %v47
    %vm51 = vcmask 261120
    %v52 = vsel %vm51, %v49, 0.0
    %53 = vadd.xlane.f32.xlu0 %v52
    %v54 = vpop.xlane.xlu0 %53
    %v55 = vsel %vm51, %v50, 0.0
    %56 = vadd.xlane.f32.xlu0 %v55
    %v57 = vpop.xlane.xlu0 %56
    %v59 = vperm.slane %v48, 0
    %v60 = vlaneseq
    %v61 = vshrl.u32 %v60, 7
    %63 = vset.pattern.permute.xlu0 %v61
    %64 = vperm.xlu0 %63, %v59
    %v65 = vpop.permute.xlu0 %64
    %v67 = vadd.f32 %v54, %v65
    %v68 = vadd.f32 %v57, %v65
    %71 = vset.pattern.permute.xlu0 0
    %72 = vperm.xlu0 %71, %v67
    %v73 = vpop.permute.xlu0 %72
    %74 = vset.pattern.permute.xlu0 0
    %75 = vperm.xlu0 %74, %v68
    %v76 = vpop.permute.xlu0 %75
    %v77 = vlaneseq
    %v78 = vand.u32 %v77, 127
    %v79 = vperm.slane %v73, %v78
    %v80 = vperm.slane %v76, %v78
    %vm81 = vcmask 1041409
    %v82 = vsel %vm81, %v80, %v79
    %vm84 = vcmask 58368
    %85 = vst.msk [vmem:[#allocation7] sm:$0x3] %vm84, %v82
    // Predicated region
    $region22: #{tpu_custom_call.1} parent=1 // pred_check
      _
    $region23: #{tpu_custom_call.1} parent=1 // pred_check_branch
      %87 = sbr.rel (0) target = $region25
    $region24: #{tpu_custom_call.1} parent=1 // pred_region
      %89 = vsyncadd [#allocation4], 0
      %s91 = sshll.u32 [#allocation7], 4
      %s92 = int_to_ptr.vmem [resolvable:$true] %s91
      %s93 = sshll.u32 %s3, 4
      %s94 = int_to_ptr.hbm [resolvable:$true] %s93
      %96 = dma.vmem_to_hbm [thread:$0]  %s92, 32, %s94, [#allocation4]
    $region25: #{tpu_custom_call.1} parent=1 // pred_fallthru
      _
    // Predicated region
    $region26: #{tpu_custom_call.1} parent=1 // pred_check
      _
    $region27: #{tpu_custom_call.1} parent=1 // pred_check_branch
      %98 = sbr.rel (0) target = $region29
    $region28: #{tpu_custom_call.1} parent=1 // pred_region
      %100 = dma.done [#allocation4], 32
    $region29: #{tpu_custom_call.1} parent=1 // pred_fallthru
      _
    %101 = vsyncpa [#allocation3], 1
    %102 = vsyncpa [#allocation6], 1
    %103 = vsyncpa [#allocation4], 1

</llo_original>
